<compile_context>
chip_gen: v6e
topology: v6e:2x2x1
jax: 0.10.0
libtpu: 0.0.40
codegen_flags: <defaults>
</compile_context>

<pallas_src>
import math
import functools

import jax
import jax.numpy as jnp
from jax.experimental import pallas as pl
from jax.experimental.pallas import tpu as pltpu


LANES = 128       # vreg lane width
SUBLANES = 8      # f32 sublane granularity
MAX_TILE_ROWS = 1024   # 1024 x 128 x 4B = 512 KiB per f32 tile (VMEM-safe on v7x)


# ---------------------------------------------------------------------------
# Parameter helpers (Barron-style affine sigmoid, as in the PyTorch module).
# ---------------------------------------------------------------------------
def affine_sigmoid(latent, lo, hi):
    return lo + (hi - lo) * jax.nn.sigmoid(latent)


def inv_affine_sigmoid(value, lo, hi):
    t = (value - lo) / (hi - lo)
    return jnp.log(t) - jnp.log1p(-t)  # logit


# ---------------------------------------------------------------------------
# Pallas kernel: elementwise fractional-Cauchy sum over n_memory+1 terms.
# All scalar parameters are baked in as immediates (coeffs already include the
# (-1)^n sign and the 1/h^a normalization).
# ---------------------------------------------------------------------------
def _frac_cauchy_kernel(x_ref, y_ref, out_ref, *, coeffs, inv_c, h):
    # x_ref / y_ref / out_ref : VMEM f32[TILE_R, 128]
    residual = x_ref[...] - y_ref[...]
    base = jnp.abs(residual) * inv_c          # == |residual / c|

    # n = 0 term (u == base)
    acc = coeffs[0] * jnp.log1p(base * base)
    # n = 1 .. N terms (static unroll; n_memory is small)
    for n in range(1, len(coeffs)):
        u = base - (n * h)
        acc = acc + coeffs[n] * jnp.log1p(u * u)

    out_ref[...] = acc


# ---------------------------------------------------------------------------
# Module-equivalent wrapper.
# ---------------------------------------------------------------------------
class FractionalCauchyLoss:
    def __init__(self, alpha_init=0.01, alpha_lo=0.001, alpha_hi=1.0,
                 c_init=0.1, c_lo=0.001, c_hi=1.0, n_memory=10, h=0.1):
        self.n_memory = n_memory
        self.h = h
        self.alpha_lo, self.alpha_hi = alpha_lo, alpha_hi
        self.c_lo, self.c_hi = c_lo, c_hi

        # Same f32 roundtrip as the PyTorch __init__ / forward.
        self.latent_alpha = inv_affine_sigmoid(
            jnp.asarray([alpha_init], dtype=jnp.float32), alpha_lo, alpha_hi)
        self.latent_c = inv_affine_sigmoid(
            jnp.asarray([c_init], dtype=jnp.float32), c_lo, c_hi)

        # Resolve alpha / c ONCE (single host sync at construction time); the
        # reference module .detach()'s the Gamma arguments anyway.
        alpha = affine_sigmoid(self.latent_alpha, alpha_lo, alpha_hi)
        c = affine_sigmoid(self.latent_c, c_lo, c_hi)
        self._alpha = float(alpha[0])
        self._c = float(c[0])

        # (-1)^n * Gamma(a+1) / (Gamma(n+1) * 2 * Gamma(a-n+1)) / h^a , n=0..N
        a = self._alpha
        inv_h_pow_a = 1.0 / (h ** a)
        coeffs = []
        for n in range(n_memory + 1):
            binom = math.gamma(a + 1.0) / (
                math.gamma(n + 1.0) * 2.0 * math.gamma(a - n + 1.0))
            coeffs.append(((-1.0) ** n) * binom * inv_h_pow_a)
        self._coeffs = tuple(float(v) for v in coeffs)
        self._inv_c = 1.0 / self._c

        self._kernel = functools.partial(
            _frac_cauchy_kernel, coeffs=self._coeffs, inv_c=self._inv_c, h=self.h)

    def __call__(self, x, y):
        orig_shape = x.shape
        flat = int(x.size)

        # Flatten + pad to a lane-dense (rows, 128) slab.
        rows = pl.cdiv(flat, LANES)
        rows = pl.cdiv(rows, SUBLANES) * SUBLANES          # sublane-align
        tile_r = min(MAX_TILE_ROWS, rows)
        rows = pl.cdiv(rows, tile_r) * tile_r              # tile-align
        pad = rows * LANES - flat

        xf = x.reshape(-1).astype(jnp.float32)
        yf = y.reshape(-1).astype(jnp.float32)
        if pad:
            xf = jnp.pad(xf, (0, pad))
            yf = jnp.pad(yf, (0, pad))
        x2 = xf.reshape(rows, LANES)
        y2 = yf.reshape(rows, LANES)

        n_tiles = rows // tile_r
        out = pl.pallas_call(
            self._kernel,
            out_shape=jax.ShapeDtypeStruct((rows, LANES), jnp.float32),
            grid=(n_tiles,),
            in_specs=[
                pl.BlockSpec((tile_r, LANES), lambda i: (i, 0)),
                pl.BlockSpec((tile_r, LANES), lambda i: (i, 0)),
            ],
            out_specs=pl.BlockSpec((tile_r, LANES), lambda i: (i, 0)),
            compiler_params=pltpu.CompilerParams(
                dimension_semantics=("parallel",)),
        )(x2, y2)

        out_flat = out.reshape(-1)
        if pad:
            out_flat = out_flat[:flat]
        return out_flat.reshape(orig_shape)


# ---------------------------------------------------------------------------
# Pure-JAX reference (faithful to the PyTorch forward) for a correctness check.
# ---------------------------------------------------------------------------
def _reference(x, y, module):
    a = module._alpha
    c = module._c
    residual = (x - y).astype(jnp.float32)
    acc = jnp.zeros_like(residual)
    for n in range(module.n_memory + 1):
        u = jnp.abs(residual / c) - n * module.h
        f_val = jnp.log(u * u + 1.0)
        binom = math.gamma(a + 1.0) / (
            math.gamma(n + 1.0) * 2.0 * math.gamma(a - n + 1.0))
        acc = acc + ((-1.0) ** n) * binom * f_val
    return acc / (module.h ** a)


if __name__ == "__main__":
    key = jax.random.PRNGKey(0)
    kx, ky = jax.random.split(key)
    x = jax.random.normal(kx, (2, 4, 16, 16), dtype=jnp.float32)
    y = jax.random.normal(ky, (2, 4, 16, 16), dtype=jnp.float32)

    loss_mod = FractionalCauchyLoss()
    out = loss_mod(x, y)
    out = jax.block_until_ready(out)

    ref = _reference(x, y, loss_mod)
    assert out.shape == x.shape and out.dtype == jnp.float32
    assert jnp.allclose(out, ref, rtol=1e-5, atol=1e-5), "mismatch vs reference"

    print("KERNEL_OK")
</pallas_src>

<mosaic_0001>
module attributes {stable_mosaic.version = 11 : i64} {
  func.func @_frac_cauchy_kernel(%arg0: i32, %arg1: memref<16x128xf32, #tpu.memory_space<vmem>>, %arg2: memref<16x128xf32, #tpu.memory_space<vmem>>, %arg3: memref<16x128xf32, #tpu.memory_space<vmem>>) attributes {dimension_semantics = [#tpu.dimension_semantics<parallel>], iteration_bounds = array<i64: 1>, scalar_prefetch = 0 : i64, scratch_operands = 0 : i64, tpu.core_type = #tpu.core_type<tc>, window_params = [{transform_indices = @transform_0, window_bounds = array<i64: 16, 128>}, {transform_indices = @transform_1, window_bounds = array<i64: 16, 128>}, {transform_indices = @transform_2, window_bounds = array<i64: 16, 128>}]} {
    %c0 = arith.constant 0 : index
    %c0_0 = arith.constant 0 : index
    %0 = vector.load %arg1[%c0, %c0_0] : memref<16x128xf32, #tpu.memory_space<vmem>>, vector<16x128xf32>
    %c0_1 = arith.constant 0 : index
    %c0_2 = arith.constant 0 : index
    %1 = vector.load %arg2[%c0_1, %c0_2] : memref<16x128xf32, #tpu.memory_space<vmem>>, vector<16x128xf32>
    %2 = arith.subf %0, %1 : vector<16x128xf32>
    %3 = math.absf %2 : vector<16x128xf32>
    %cst = arith.constant 1.000000e+01 : f32
    %4 = vector.broadcast %cst : f32 to vector<16x128xf32>
    %5 = arith.mulf %3, %4 : vector<16x128xf32>
    %6 = arith.mulf %5, %5 : vector<16x128xf32>
    %7 = math.log1p %6 : vector<16x128xf32>
    %cst_3 = arith.constant 0.511646509 : f32
    %8 = vector.broadcast %cst_3 : f32 to vector<16x128xf32>
    %9 = arith.mulf %8, %7 : vector<16x128xf32>
    %cst_4 = arith.constant 1.000000e-01 : f32
    %10 = vector.broadcast %cst_4 : f32 to vector<16x128xf32>
    %11 = arith.subf %5, %10 : vector<16x128xf32>
    %12 = arith.mulf %11, %11 : vector<16x128xf32>
    %13 = math.log1p %12 : vector<16x128xf32>
    %cst_5 = arith.constant -0.00511646457 : f32
    %14 = vector.broadcast %cst_5 : f32 to vector<16x128xf32>
    %15 = arith.mulf %14, %13 : vector<16x128xf32>
    %16 = arith.addf %9, %15 : vector<16x128xf32>
    %cst_6 = arith.constant 2.000000e-01 : f32
    %17 = vector.broadcast %cst_6 : f32 to vector<16x128xf32>
    %18 = arith.subf %5, %17 : vector<16x128xf32>
    %19 = arith.mulf %18, %18 : vector<16x128xf32>
    %20 = math.log1p %19 : vector<16x128xf32>
    %cst_7 = arith.constant -0.00253264979 : f32
    %21 = vector.broadcast %cst_7 : f32 to vector<16x128xf32>
    %22 = arith.mulf %21, %20 : vector<16x128xf32>
    %23 = arith.addf %16, %22 : vector<16x128xf32>
    %cst_8 = arith.constant 3.000000e-01 : f32
    %24 = vector.broadcast %cst_8 : f32 to vector<16x128xf32>
    %25 = arith.subf %5, %24 : vector<16x128xf32>
    %26 = arith.mulf %25, %25 : vector<16x128xf32>
    %27 = math.log1p %26 : vector<16x128xf32>
    %cst_9 = arith.constant -0.00167999102 : f32
    %28 = vector.broadcast %cst_9 : f32 to vector<16x128xf32>
    %29 = arith.mulf %28, %27 : vector<16x128xf32>
    %30 = arith.addf %23, %29 : vector<16x128xf32>
    %cst_10 = arith.constant 4.000000e-01 : f32
    %31 = vector.broadcast %cst_10 : f32 to vector<16x128xf32>
    %32 = arith.subf %5, %31 : vector<16x128xf32>
    %33 = arith.mulf %32, %32 : vector<16x128xf32>
    %34 = math.log1p %33 : vector<16x128xf32>
    %cst_11 = arith.constant -0.00125579338 : f32
    %35 = vector.broadcast %cst_11 : f32 to vector<16x128xf32>
    %36 = arith.mulf %35, %34 : vector<16x128xf32>
    %37 = arith.addf %30, %36 : vector<16x128xf32>
    %cst_12 = arith.constant 5.000000e-01 : f32
    %38 = vector.broadcast %cst_12 : f32 to vector<16x128xf32>
    %39 = arith.subf %5, %38 : vector<16x128xf32>
    %40 = arith.mulf %39, %39 : vector<16x128xf32>
    %41 = math.log1p %40 : vector<16x128xf32>
    %cst_13 = arith.constant -0.00100212311 : f32
    %42 = vector.broadcast %cst_13 : f32 to vector<16x128xf32>
    %43 = arith.mulf %42, %41 : vector<16x128xf32>
    %44 = arith.addf %37, %43 : vector<16x128xf32>
    %cst_14 = arith.constant 6.000000e-01 : f32
    %45 = vector.broadcast %cst_14 : f32 to vector<16x128xf32>
    %46 = arith.subf %5, %45 : vector<16x128xf32>
    %47 = arith.mulf %46, %46 : vector<16x128xf32>
    %48 = math.log1p %47 : vector<16x128xf32>
    %cst_15 = arith.constant -8.33432365E-4 : f32
    %49 = vector.broadcast %cst_15 : f32 to vector<16x128xf32>
    %50 = arith.mulf %49, %48 : vector<16x128xf32>
    %51 = arith.addf %44, %50 : vector<16x128xf32>
    %cst_16 = arith.constant 0.699999988 : f32
    %52 = vector.broadcast %cst_16 : f32 to vector<16x128xf32>
    %53 = arith.subf %5, %52 : vector<16x128xf32>
    %54 = arith.mulf %53, %53 : vector<16x128xf32>
    %55 = math.log1p %54 : vector<16x128xf32>
    %cst_17 = arith.constant -7.131800e-04 : f32
    %56 = vector.broadcast %cst_17 : f32 to vector<16x128xf32>
    %57 = arith.mulf %56, %55 : vector<16x128xf32>
    %58 = arith.addf %51, %57 : vector<16x128xf32>
    %cst_18 = arith.constant 8.000000e-01 : f32
    %59 = vector.broadcast %cst_18 : f32 to vector<16x128xf32>
    %60 = arith.subf %5, %59 : vector<16x128xf32>
    %61 = arith.mulf %60, %60 : vector<16x128xf32>
    %62 = math.log1p %61 : vector<16x128xf32>
    %cst_19 = arith.constant -6.231410e-04 : f32
    %63 = vector.broadcast %cst_19 : f32 to vector<16x128xf32>
    %64 = arith.mulf %63, %62 : vector<16x128xf32>
    %65 = arith.addf %58, %64 : vector<16x128xf32>
    %cst_20 = arith.constant 0.899999976 : f32
    %66 = vector.broadcast %cst_20 : f32 to vector<16x128xf32>
    %67 = arith.subf %5, %66 : vector<16x128xf32>
    %68 = arith.mulf %67, %67 : vector<16x128xf32>
    %69 = math.log1p %68 : vector<16x128xf32>
    %cst_21 = arith.constant -5.53210732E-4 : f32
    %70 = vector.broadcast %cst_21 : f32 to vector<16x128xf32>
    %71 = arith.mulf %70, %69 : vector<16x128xf32>
    %72 = arith.addf %65, %71 : vector<16x128xf32>
    %cst_22 = arith.constant 1.000000e+00 : f32
    %73 = vector.broadcast %cst_22 : f32 to vector<16x128xf32>
    %74 = arith.subf %5, %73 : vector<16x128xf32>
    %75 = arith.mulf %74, %74 : vector<16x128xf32>
    %76 = math.log1p %75 : vector<16x128xf32>
    %cst_23 = arith.constant -4.97336441E-4 : f32
    %77 = vector.broadcast %cst_23 : f32 to vector<16x128xf32>
    %78 = arith.mulf %77, %76 : vector<16x128xf32>
    %79 = arith.addf %72, %78 : vector<16x128xf32>
    %c0_24 = arith.constant 0 : index
    %c0_25 = arith.constant 0 : index
    %80 = vector.load %arg3[%c0_24, %c0_25] : memref<16x128xf32, #tpu.memory_space<vmem>>, vector<16x128xf32>
    tpu.vector_store %arg3[%c0_24, %c0_25], %79 {strides = array<i32>} : memref<16x128xf32, #tpu.memory_space<vmem>>, vector<16x128xf32>,
    return
  }
  func.func @transform_0(%arg0: i32) -> (i32, i32) {
    %c0_i32 = arith.constant 0 : i32
    %c0_i32_0 = arith.constant 0 : i32
    return %arg0, %c0_i32 : i32, i32
  }
  func.func @transform_1(%arg0: i32) -> (i32, i32) {
    %c0_i32 = arith.constant 0 : i32
    %c0_i32_0 = arith.constant 0 : i32
    return %arg0, %c0_i32 : i32, i32
  }
  func.func @transform_2(%arg0: i32) -> (i32, i32) {
    %c0_i32 = arith.constant 0 : i32
    %c0_i32_0 = arith.constant 0 : i32
    return %arg0, %c0_i32 : i32, i32
  }
}

</mosaic_0001>

<llo_original>
// kernel: tpu_custom_call.1
$region0: #{tpu_custom_call.1}
  #allocation0 [shape = 'u32[]', space=smem, size = 0x4, offset = 0x4, fixed_abs, tag = 'smem constant byte address 0x4 - core index']
  #allocation1 [shape = 'u32[144,128]{1,0:T(1,128)}', space=vmem, size = 0x12000, scoped, tag = 'internal scratch']
  %s0 = inlined_call_operand.hbm [shape: f32[16,128], index: 0, kind: input, shape index: {}]
  %s1 = inlined_call_operand.hbm [shape: f32[16,128], index: 1, kind: input, shape index: {}]
  %s2 = inlined_call_operand.hbm [shape: f32[16,128], index: 2, kind: output, shape index: {}]
  %s3 = sld [smem:[#allocation0]]
  $region26: #{tpu_custom_call.1} parent=0
    _
  %s5 = ssub.s32 1, %s3
  %s6 = scalar_select 0, %s5, %s3
  $region1: #{tpu_custom_call.1} parent=0
    #allocation2 [shape = 'u8[8192]{0}', space=vmem, size = 0x2000, scoped, tag = 'input window, operand 0, single buffered']
    #allocation3 [shape = 's32[1]{0}', space=sflag, size = 0x4, scoped, tag = 'scoped memory for tpu_custom_call.1']
    #allocation4 [shape = 's32[1]{0}', space=sflag, size = 0x4, scoped, tag = 'scoped memory for tpu_custom_call.1']
    #allocation5 [shape = 'u8[8192]{0}', space=vmem, size = 0x2000, scoped, tag = 'input window, operand 1, single buffered']
    #allocation6 [shape = 's32[1]{0}', space=sflag, size = 0x4, scoped, tag = 'scoped memory for tpu_custom_call.1']
    #allocation7 [shape = 'u8[8192]{0}', space=vmem, size = 0x2000, scoped, tag = 'output window, operand 0, single buffered']
    %7 = vsyncpa [#allocation3], 0
    %8 = vsyncpa [#allocation6], 0
    %9 = vsyncpa [#allocation4], 0
    // Predicated region
    $region2: #{tpu_custom_call.1} parent=1 // pred_check
      _
    $region3: #{tpu_custom_call.1} parent=1 // pred_check_branch
      %11 = sbr.rel (0) target = $region5
    $region4: #{tpu_custom_call.1} parent=1 // pred_region
      %s13 = ssub.s32 256, 256
      %14 = vsyncadd [#allocation3], %s13
      %s15 = sshll.u32 [#allocation2], 4
      %s16 = int_to_ptr.vmem [resolvable:$true] %s15
      %21 = dma.hbm_to_vmem [thread:$0]  %s0, 256, %s16, [#allocation3], 128, 128, 8
    $region5: #{tpu_custom_call.1} parent=1 // pred_fallthru
      _
    // Predicated region
    $region6: #{tpu_custom_call.1} parent=1 // pred_check
      _
    $region7: #{tpu_custom_call.1} parent=1 // pred_check_branch
      %23 = sbr.rel (0) target = $region9
    $region8: #{tpu_custom_call.1} parent=1 // pred_region
      %s25 = ssub.s32 256, 256
      %26 = vsyncadd [#allocation6], %s25
      %s27 = sshll.u32 [#allocation5], 4
      %s28 = int_to_ptr.vmem [resolvable:$true] %s27
      %33 = dma.hbm_to_vmem [thread:$0]  %s1, 256, %s28, [#allocation6], 128, 128, 8
    $region9: #{tpu_custom_call.1} parent=1 // pred_fallthru
      _
    // Predicated region
    $region10: #{tpu_custom_call.1} parent=1 // pred_check
      _
    $region11: #{tpu_custom_call.1} parent=1 // pred_check_branch
      %35 = sbr.rel (0) target = $region13
    $region12: #{tpu_custom_call.1} parent=1 // pred_region
      %36 = dma.done [#allocation3], 256
    $region13: #{tpu_custom_call.1} parent=1 // pred_fallthru
      _
    // Predicated region
    $region14: #{tpu_custom_call.1} parent=1 // pred_check
      _
    $region15: #{tpu_custom_call.1} parent=1 // pred_check_branch
      %38 = sbr.rel (0) target = $region17
    $region16: #{tpu_custom_call.1} parent=1 // pred_region
      %39 = dma.done [#allocation6], 256
    $region17: #{tpu_custom_call.1} parent=1 // pred_fallthru
      _
    %v40 = vld [vmem:[#allocation2] sm:$0xff]
    %v41 = vld [vmem:[#allocation2 + $0x8] sm:$0xff]
    %v42 = vld [vmem:[#allocation5] sm:$0xff]
    %v43 = vld [vmem:[#allocation5 + $0x8] sm:$0xff]
    %v44 = vsub.f32 %v40, %v42
    %v45 = vsub.f32 %v41, %v43
    %v46 = vand.u32 2147483647, %v44
    %v47 = vand.u32 2147483647, %v45
    %v48 = vmul.f32 %v46, 10.0
    %v49 = vmul.f32 %v47, 10.0
    %v50 = vmul.f32 %v48, %v48
    %v51 = vmul.f32 %v49, %v49
    %v52 = vadd.f32 %v50, 1.0
    %v53 = vlog2.pop %v52
    %v54 = vmul.f32 %v53, 0.6931472
    %v55 = vmul.f32 -0.5, %v50
    %v56 = vadd.f32 %v55, 1.0
    %v57 = vmul.f32 %v56, %v50
    %v58 = vand.u32 2147483647, %v50
    %vm59 = vcmp.lt.f32.partialorder %v58, 0.0004427343
    %v60 = vsel %vm59, %v57, %v54
    %v61 = vadd.f32 %v51, 1.0
    %v62 = vlog2.pop %v61
    %v63 = vmul.f32 %v62, 0.6931472
    %v64 = vmul.f32 -0.5, %v51
    %v65 = vadd.f32 %v64, 1.0
    %v66 = vmul.f32 %v65, %v51
    %v67 = vand.u32 2147483647, %v51
    %vm68 = vcmp.lt.f32.partialorder %v67, 0.0004427343
    %v69 = vsel %vm68, %v66, %v63
    %v70 = vmul.f32 %v60, 0.5116465
    %v71 = vmul.f32 %v69, 0.5116465
    %v72 = vsub.f32 %v48, 0.1
    %v73 = vsub.f32 %v49, 0.1
    %v74 = vmul.f32 %v72, %v72
    %v75 = vmul.f32 %v73, %v73
    %v76 = vadd.f32 %v74, 1.0
    %v77 = vlog2.pop %v76
    %v78 = vmul.f32 %v77, 0.6931472
    %v79 = vmul.f32 -0.5, %v74
    %v80 = vadd.f32 %v79, 1.0
    %v81 = vmul.f32 %v80, %v74
    %v82 = vand.u32 2147483647, %v74
    %vm83 = vcmp.lt.f32.partialorder %v82, 0.0004427343
    %v84 = vsel %vm83, %v81, %v78
    %v85 = vadd.f32 %v75, 1.0
    %v86 = vlog2.pop %v85
    %v87 = vmul.f32 %v86, 0.6931472
    %v88 = vmul.f32 -0.5, %v75
    %v89 = vadd.f32 %v88, 1.0
    %v90 = vmul.f32 %v89, %v75
    %v91 = vand.u32 2147483647, %v75
    %vm92 = vcmp.lt.f32.partialorder %v91, 0.0004427343
    %v93 = vsel %vm92, %v90, %v87
    %v94 = vmul.f32 %v84, -0.0051164646
    %v95 = vmul.f32 %v93, -0.0051164646
    %v96 = vadd.f32 %v70, %v94
    %v97 = vadd.f32 %v71, %v95
    %v98 = vsub.f32 %v48, 0.2
    %v99 = vsub.f32 %v49, 0.2
    %v100 = vmul.f32 %v98, %v98
    %v101 = vmul.f32 %v99, %v99
    %v102 = vadd.f32 %v100, 1.0
    %v103 = vlog2.pop %v102
    %v104 = vmul.f32 %v103, 0.6931472
    %v105 = vmul.f32 -0.5, %v100
    %v106 = vadd.f32 %v105, 1.0
    %v107 = vmul.f32 %v106, %v100
    %v108 = vand.u32 2147483647, %v100
    %vm109 = vcmp.lt.f32.partialorder %v108, 0.0004427343
    %v110 = vsel %vm109, %v107, %v104
    %v111 = vadd.f32 %v101, 1.0
    %v112 = vlog2.pop %v111
    %v113 = vmul.f32 %v112, 0.6931472
    %v114 = vmul.f32 -0.5, %v101
    %v115 = vadd.f32 %v114, 1.0
    %v116 = vmul.f32 %v115, %v101
    %v117 = vand.u32 2147483647, %v101
    %vm118 = vcmp.lt.f32.partialorder %v117, 0.0004427343
    %v119 = vsel %vm118, %v116, %v113
    %v120 = vmul.f32 %v110, -0.0025326498
    %v121 = vmul.f32 %v119, -0.0025326498
    %v122 = vadd.f32 %v96, %v120
    %v123 = vadd.f32 %v97, %v121
    %v124 = vsub.f32 %v48, 0.3
    %v125 = vsub.f32 %v49, 0.3
    %v126 = vmul.f32 %v124, %v124
    %v127 = vmul.f32 %v125, %v125
    %v128 = vadd.f32 %v126, 1.0
    %v129 = vlog2.pop %v128
    %v130 = vmul.f32 %v129, 0.6931472
    %v131 = vmul.f32 -0.5, %v126
    %v132 = vadd.f32 %v131, 1.0
    %v133 = vmul.f32 %v132, %v126
    %v134 = vand.u32 2147483647, %v126
    %vm135 = vcmp.lt.f32.partialorder %v134, 0.0004427343
    %v136 = vsel %vm135, %v133, %v130
    %v137 = vadd.f32 %v127, 1.0
    %v138 = vlog2.pop %v137
    %v139 = vmul.f32 %v138, 0.6931472
    %v140 = vmul.f32 -0.5, %v127
    %v141 = vadd.f32 %v140, 1.0
    %v142 = vmul.f32 %v141, %v127
    %v143 = vand.u32 2147483647, %v127
    %vm144 = vcmp.lt.f32.partialorder %v143, 0.0004427343
    %v145 = vsel %vm144, %v142, %v139
    %v146 = vmul.f32 %v136, -0.001679991
    %v147 = vmul.f32 %v145, -0.001679991
    %v148 = vadd.f32 %v122, %v146
    %v149 = vadd.f32 %v123, %v147
    %v150 = vsub.f32 %v48, 0.4
    %v151 = vsub.f32 %v49, 0.4
    %v152 = vmul.f32 %v150, %v150
    %v153 = vmul.f32 %v151, %v151
    %v154 = vadd.f32 %v152, 1.0
    %v155 = vlog2.pop %v154
    %v156 = vmul.f32 %v155, 0.6931472
    %v157 = vmul.f32 -0.5, %v152
    %v158 = vadd.f32 %v157, 1.0
    %v159 = vmul.f32 %v158, %v152
    %v160 = vand.u32 2147483647, %v152
    %vm161 = vcmp.lt.f32.partialorder %v160, 0.0004427343
    %v162 = vsel %vm161, %v159, %v156
    %v163 = vadd.f32 %v153, 1.0
    %v164 = vlog2.pop %v163
    %v165 = vmul.f32 %v164, 0.6931472
    %v166 = vmul.f32 -0.5, %v153
    %v167 = vadd.f32 %v166, 1.0
    %v168 = vmul.f32 %v167, %v153
    %v169 = vand.u32 2147483647, %v153
    %vm170 = vcmp.lt.f32.partialorder %v169, 0.0004427343
    %v171 = vsel %vm170, %v168, %v165
    %v172 = vmul.f32 %v162, -0.0012557934
    %v173 = vmul.f32 %v171, -0.0012557934
    %v174 = vadd.f32 %v148, %v172
    %v175 = vadd.f32 %v149, %v173
    %v176 = vsub.f32 %v48, 0.5
    %v177 = vsub.f32 %v49, 0.5
    %v178 = vmul.f32 %v176, %v176
    %v179 = vmul.f32 %v177, %v177
    %v180 = vadd.f32 %v178, 1.0
    %v181 = vlog2.pop %v180
    %v182 = vmul.f32 %v181, 0.6931472
    %v183 = vmul.f32 -0.5, %v178
    %v184 = vadd.f32 %v183, 1.0
    %v185 = vmul.f32 %v184, %v178
    %v186 = vand.u32 2147483647, %v178
    %vm187 = vcmp.lt.f32.partialorder %v186, 0.0004427343
    %v188 = vsel %vm187, %v185, %v182
    %v189 = vadd.f32 %v179, 1.0
    %v190 = vlog2.pop %v189
    %v191 = vmul.f32 %v190, 0.6931472
    %v192 = vmul.f32 -0.5, %v179
    %v193 = vadd.f32 %v192, 1.0
    %v194 = vmul.f32 %v193, %v179
    %v195 = vand.u32 2147483647, %v179
    %vm196 = vcmp.lt.f32.partialorder %v195, 0.0004427343
    %v197 = vsel %vm196, %v194, %v191
    %v198 = vmul.f32 %v188, -0.0010021231
    %v199 = vmul.f32 %v197, -0.0010021231
    %v200 = vadd.f32 %v174, %v198
    %v201 = vadd.f32 %v175, %v199
    %v202 = vsub.f32 %v48, 0.6
    %v203 = vsub.f32 %v49, 0.6
    %v204 = vmul.f32 %v202, %v202
    %v205 = vmul.f32 %v203, %v203
    %v206 = vadd.f32 %v204, 1.0
    %v207 = vlog2.pop %v206
    %v208 = vmul.f32 %v207, 0.6931472
    %v209 = vmul.f32 -0.5, %v204
    %v210 = vadd.f32 %v209, 1.0
    %v211 = vmul.f32 %v210, %v204
    %v212 = vand.u32 2147483647, %v204
    %vm213 = vcmp.lt.f32.partialorder %v212, 0.0004427343
    %v214 = vsel %vm213, %v211, %v208
    %v215 = vadd.f32 %v205, 1.0
    %v216 = vlog2.pop %v215
    %v217 = vmul.f32 %v216, 0.6931472
    %v218 = vmul.f32 -0.5, %v205
    %v219 = vadd.f32 %v218, 1.0
    %v220 = vmul.f32 %v219, %v205
    %v221 = vand.u32 2147483647, %v205
    %vm222 = vcmp.lt.f32.partialorder %v221, 0.0004427343
    %v223 = vsel %vm222, %v220, %v217
    %v224 = vmul.f32 %v214, -0.00083343236
    %v225 = vmul.f32 %v223, -0.00083343236
    %v226 = vadd.f32 %v200, %v224
    %v227 = vadd.f32 %v201, %v225
    %v228 = vsub.f32 %v48, 0.7
    %v229 = vsub.f32 %v49, 0.7
    %v230 = vmul.f32 %v228, %v228
    %v231 = vmul.f32 %v229, %v229
    %v232 = vadd.f32 %v230, 1.0
    %v233 = vlog2.pop %v232
    %v234 = vmul.f32 %v233, 0.6931472
    %v235 = vmul.f32 -0.5, %v230
    %v236 = vadd.f32 %v235, 1.0
    %v237 = vmul.f32 %v236, %v230
    %v238 = vand.u32 2147483647, %v230
    %vm239 = vcmp.lt.f32.partialorder %v238, 0.0004427343
    %v240 = vsel %vm239, %v237, %v234
    %v241 = vadd.f32 %v231, 1.0
    %v242 = vlog2.pop %v241
    %v243 = vmul.f32 %v242, 0.6931472
    %v244 = vmul.f32 -0.5, %v231
    %v245 = vadd.f32 %v244, 1.0
    %v246 = vmul.f32 %v245, %v231
    %v247 = vand.u32 2147483647, %v231
    %vm248 = vcmp.lt.f32.partialorder %v247, 0.0004427343
    %v249 = vsel %vm248, %v246, %v243
    %v250 = vmul.f32 %v240, -0.00071318
    %v251 = vmul.f32 %v249, -0.00071318
    %v252 = vadd.f32 %v226, %v250
    %v253 = vadd.f32 %v227, %v251
    %v254 = vsub.f32 %v48, 0.8
    %v255 = vsub.f32 %v49, 0.8
    %v256 = vmul.f32 %v254, %v254
    %v257 = vmul.f32 %v255, %v255
    %v258 = vadd.f32 %v256, 1.0
    %v259 = vlog2.pop %v258
    %v260 = vmul.f32 %v259, 0.6931472
    %v261 = vmul.f32 -0.5, %v256
    %v262 = vadd.f32 %v261, 1.0
    %v263 = vmul.f32 %v262, %v256
    %v264 = vand.u32 2147483647, %v256
    %vm265 = vcmp.lt.f32.partialorder %v264, 0.0004427343
    %v266 = vsel %vm265, %v263, %v260
    %v267 = vadd.f32 %v257, 1.0
    %v268 = vlog2.pop %v267
    %v269 = vmul.f32 %v268, 0.6931472
    %v270 = vmul.f32 -0.5, %v257
    %v271 = vadd.f32 %v270, 1.0
    %v272 = vmul.f32 %v271, %v257
    %v273 = vand.u32 2147483647, %v257
    %vm274 = vcmp.lt.f32.partialorder %v273, 0.0004427343
    %v275 = vsel %vm274, %v272, %v269
    %v276 = vmul.f32 %v266, -0.000623141
    %v277 = vmul.f32 %v275, -0.000623141
    %v278 = vadd.f32 %v252, %v276
    %v279 = vadd.f32 %v253, %v277
    %v280 = vsub.f32 %v48, 0.9
    %v281 = vsub.f32 %v49, 0.9
    %v282 = vmul.f32 %v280, %v280
    %v283 = vmul.f32 %v281, %v281
    %v284 = vadd.f32 %v282, 1.0
    %v285 = vlog2.pop %v284
    %v286 = vmul.f32 %v285, 0.6931472
    %v287 = vmul.f32 -0.5, %v282
    %v288 = vadd.f32 %v287, 1.0
    %v289 = vmul.f32 %v288, %v282
    %v290 = vand.u32 2147483647, %v282
    %vm291 = vcmp.lt.f32.partialorder %v290, 0.0004427343
    %v292 = vsel %vm291, %v289, %v286
    %v293 = vadd.f32 %v283, 1.0
    %v294 = vlog2.pop %v293
    %v295 = vmul.f32 %v294, 0.6931472
    %v296 = vmul.f32 -0.5, %v283
    %v297 = vadd.f32 %v296, 1.0
    %v298 = vmul.f32 %v297, %v283
    %v299 = vand.u32 2147483647, %v283
    %vm300 = vcmp.lt.f32.partialorder %v299, 0.0004427343
    %v301 = vsel %vm300, %v298, %v295
    %v302 = vmul.f32 %v292, -0.00055321073
    %v303 = vmul.f32 %v301, -0.00055321073
    %v304 = vadd.f32 %v278, %v302
    %v305 = vadd.f32 %v279, %v303
    %v306 = vsub.f32 %v48, 1.0
    %v307 = vsub.f32 %v49, 1.0
    %v308 = vmul.f32 %v306, %v306
    %v309 = vmul.f32 %v307, %v307
    %v310 = vadd.f32 %v308, 1.0
    %v311 = vlog2.pop %v310
    %v312 = vmul.f32 %v311, 0.6931472
    %v313 = vmul.f32 -0.5, %v308
    %v314 = vadd.f32 %v313, 1.0
    %v315 = vmul.f32 %v314, %v308
    %v316 = vand.u32 2147483647, %v308
    %vm317 = vcmp.lt.f32.partialorder %v316, 0.0004427343
    %v318 = vsel %vm317, %v315, %v312
    %v319 = vadd.f32 %v309, 1.0
    %v320 = vlog2.pop %v319
    %v321 = vmul.f32 %v320, 0.6931472
    %v322 = vmul.f32 -0.5, %v309
    %v323 = vadd.f32 %v322, 1.0
    %v324 = vmul.f32 %v323, %v309
    %v325 = vand.u32 2147483647, %v309
    %vm326 = vcmp.lt.f32.partialorder %v325, 0.0004427343
    %v327 = vsel %vm326, %v324, %v321
    %v328 = vmul.f32 %v318, -0.00049733644
    %v329 = vmul.f32 %v327, -0.00049733644
    %v330 = vadd.f32 %v304, %v328
    %v331 = vadd.f32 %v305, %v329
    %332 = vst [vmem:[#allocation7] sm:$0xff] %v330
    %333 = vst [vmem:[#allocation7 + $0x8] sm:$0xff] %v331
    // Predicated region
    $region18: #{tpu_custom_call.1} parent=1 // pred_check
      _
    $region19: #{tpu_custom_call.1} parent=1 // pred_check_branch
      %335 = sbr.rel (0) target = $region21
    $region20: #{tpu_custom_call.1} parent=1 // pred_region
      %s337 = ssub.s32 256, 256
      %338 = vsyncadd [#allocation4], %s337
      %s339 = sshll.u32 [#allocation7], 4
      %s340 = int_to_ptr.vmem [resolvable:$true] %s339
      %345 = dma.vmem_to_hbm [thread:$0]  %s340, 256, %s2, [#allocation4], 128, 128, 8
    $region21: #{tpu_custom_call.1} parent=1 // pred_fallthru
      _
    // Predicated region
    $region22: #{tpu_custom_call.1} parent=1 // pred_check
      _
    $region23: #{tpu_custom_call.1} parent=1 // pred_check_branch
      %347 = sbr.rel (0) target = $region25
    $region24: #{tpu_custom_call.1} parent=1 // pred_region
      %348 = dma.done [#allocation4], 256
    $region25: #{tpu_custom_call.1} parent=1 // pred_fallthru
      _
    %349 = vsyncpa [#allocation3], 1
    %350 = vsyncpa [#allocation6], 1
    %351 = vsyncpa [#allocation4], 1

</llo_original>
